<compile_context>
chip_gen: v5e
topology: v5e:2x2
jax: 0.10.0
libtpu: 0.0.40
codegen_flags: <defaults>
</compile_context>

<pallas_src>
import functools
import math

import jax
import jax.numpy as jnp
from jax import lax
from jax.experimental import pallas as pl
from jax.experimental.pallas import tpu as pltpu


# ---------------------------------------------------------------------------
# In-kernel helpers
# ---------------------------------------------------------------------------
def _sum_last2(v):
    """Sum over the (channel-chunk, spatial) axes of (TN, TG, cpg, S), keepdims."""
    return jnp.sum(jnp.sum(v, axis=3, keepdims=True), axis=2, keepdims=True)


# ---------------------------------------------------------------------------
# Kernels
# ---------------------------------------------------------------------------
def _mgn_kernel_nomask(x_ref, w_ref, b_ref, o_ref, *, eps):
    # x_ref/o_ref: (TN, TG, cpg, S); w_ref/b_ref: (1, TG, cpg, 1)
    cpg = x_ref.shape[2]
    s = x_ref.shape[3]
    n = float(cpg * s)

    x = x_ref[...].astype(jnp.float32)
    s1 = _sum_last2(x)                               # (TN, TG, 1, 1)
    s2 = _sum_last2(x * x)
    mean = s1 / n
    # torch.var default is unbiased -> /(n - 1); one-pass form (f32 accum).
    var = (s2 - s1 * mean) / (n - 1.0)
    inv_std = lax.rsqrt(var + eps)

    w = w_ref[...].astype(jnp.float32)               # (1, TG, cpg, 1)
    b = b_ref[...].astype(jnp.float32)
    scale = inv_std * w                              # (TN, TG, cpg, 1)
    shift = b - mean * scale
    # Single full-tile FMA + single full-tile store (lane-dense).
    o_ref[...] = (x * scale + shift).astype(o_ref.dtype)


def _mgn_kernel_mask(x_ref, m_ref, w_ref, b_ref, o_ref, *, eps):
    # x_ref/o_ref: (TN, TG, cpg, S); m_ref: (TN, 1, 1, S); w/b: (1, TG, cpg, 1)
    cpg = x_ref.shape[2]
    s = x_ref.shape[3]
    n = float(cpg * s)

    x = x_ref[...].astype(jnp.float32)
    mask = m_ref[...].astype(jnp.float32)            # binary {0,1}

    # masked count per group: every channel of a group shares the spatial mask.
    m = float(cpg) * jnp.sum(mask, axis=3, keepdims=True)       # (TN, 1, 1, 1)

    xm = x * mask                                    # mask broadcasts over (TG, cpg)
    s1 = _sum_last2(x)                               # (TN, TG, 1, 1)
    s2 = _sum_last2(x * x)
    sm1 = _sum_last2(xm)
    sm2 = _sum_last2(xm * x)

    mean_bias = s1 / n
    mean_real = mean_bias * (n / (n - m + eps))

    # x_fulfill = x*(1-mask) + mean_real*mask (binary mask), without
    # materializing it:
    #   sum(x_f)   = s1 - sm1 + mean_real   * m
    #   sum(x_f^2) = s2 - sm2 + mean_real^2 * m
    sf1 = s1 - sm1 + mean_real * m
    sf2 = s2 - sm2 + mean_real * mean_real * m
    var_bias = (sf2 - sf1 * sf1 / n) / (n - 1.0)     # unbiased var of x_fulfill
    var_real = var_bias * ((n - 1.0) / (n - m - 1.0 + eps))
    inv_std = lax.rsqrt(var_real + eps)

    w = w_ref[...].astype(jnp.float32)
    b = b_ref[...].astype(jnp.float32)
    scale = inv_std * w                              # (TN, TG, cpg, 1)
    shift = b - mean_real * scale
    o_ref[...] = (x * scale + shift).astype(o_ref.dtype)


# ---------------------------------------------------------------------------
# Block-size heuristic (chip-aware)
# ---------------------------------------------------------------------------
def _round_up(v, mult):
    return ((v + mult - 1) // mult) * mult


def _vmem_capacity_bytes():
    try:
        info = pltpu.get_tpu_info()
        cap = getattr(info, "vmem_capacity_bytes", None)
        if cap:
            return int(cap)
    except Exception:
        pass
    return 64 * 1024 * 1024        # conservative (v7x-sized) default


def _choose_blocks(N, G, cpg, spatial, x_itemsize, o_itemsize,
                   block_batch=None, block_groups=None):
    """Pick (TN, TG) block sizes and a scoped-VMEM limit.

    Budget accounts for (8,128) sublane/lane padding of the trailing
    (cpg, spatial) dims, the 2x double-buffered input and output pipeline
    buffers, and ~4 tile-sized f32 temporaries live inside the kernel.
    """
    pad_cell = _round_up(cpg, 8) * _round_up(spatial, 128)   # padded elems / (n, g)
    cell_bytes = pad_cell * (2 * x_itemsize + 2 * o_itemsize + 4 * 4)

    phys = _vmem_capacity_bytes()
    # ~25 MiB of tile budget on v7x (64 MiB VMEM), ~48 MiB on v5e / v6e (128 MiB).
    budget = min(2 * phys // 5, 48 * 1024 * 1024)

    div_n = [d for d in range(1, N + 1) if N % d == 0]
    div_g = [d for d in range(1, G + 1) if G % d == 0]
    if block_batch is not None:
        div_n = [int(block_batch)]
    if block_groups is not None:
        div_g = [int(block_groups)]

    def pick(require_two_blocks):
        best = None
        for tn in div_n:
            for tg in div_g:
                if tn * tg * cell_bytes > budget:
                    continue
                if require_two_blocks and (N // tn) * (G // tg) < 2:
                    continue
                key = (tn * tg, tg)          # maximize bytes/step, prefer wide TG
                if best is None or key > best[0]:
                    best = (key, tn, tg)
        return None if best is None else (best[1], best[2])

    # Keep both v7x TensorCores busy when there is enough work to split.
    choice = pick(require_two_blocks=(N * G >= 2))
    if choice is None:
        choice = pick(require_two_blocks=False)
    if choice is None:
        # Even a single (1, 1, cpg, spatial) block overflows the budget.
        # TODO(synk): D-chunked two-pass path for very large feature maps.
        choice = (int(block_batch) if block_batch is not None else 1,
                  int(block_groups) if block_groups is not None else 1)

    tn, tg = choice
    vmem_limit = int(min(max(phys - (16 << 20), 32 << 20), 100 * 1024 * 1024))
    return tn, tg, vmem_limit


# ---------------------------------------------------------------------------
# Wrapper
# ---------------------------------------------------------------------------
def mask_group_norm(x, num_groups, weight=None, bias=None, mask=None, eps=1e-5,
                    block_batch=None, block_groups=None):
    """Pallas implementation of MaskGroupNorm.forward.

    x:      (N, C, *spatial)
    weight: (1, C, 1) or (C,) affine scale (or None -> ones)
    bias:   (1, C, 1) or (C,) affine shift (or None -> zeros)
    mask:   optional, reshapeable to (N, prod(spatial)); binary, 1 = padded.
    """
    original_shape = x.shape
    N, C = int(original_shape[0]), int(original_shape[1])
    spatial = int(math.prod(original_shape[2:])) if len(original_shape) > 2 else 1
    G = int(num_groups)
    assert C % G == 0, "num_channels must be divisible by num_groups"
    cpg = C // G

    xg = x.reshape(N, G, cpg, spatial)

    if weight is None:
        weight = jnp.ones((C,), dtype=x.dtype)
    if bias is None:
        bias = jnp.zeros((C,), dtype=x.dtype)
    w4 = jnp.asarray(weight).reshape(1, G, cpg, 1)
    b4 = jnp.asarray(bias).reshape(1, G, cpg, 1)

    if block_batch is not None:
        assert N % int(block_batch) == 0, "block_batch must divide N"
    if block_groups is not None:
        assert G % int(block_groups) == 0, "block_groups must divide num_groups"

    TN, TG, vmem_limit = _choose_blocks(
        N, G, cpg, spatial,
        x_itemsize=jnp.dtype(x.dtype).itemsize,
        o_itemsize=jnp.dtype(x.dtype).itemsize,
        block_batch=block_batch, block_groups=block_groups)

    grid = (N // TN, G // TG)
    x_spec = pl.BlockSpec((TN, TG, cpg, spatial), lambda i, j: (i, j, 0, 0))
    wb_spec = pl.BlockSpec((1, TG, cpg, 1), lambda i, j: (0, j, 0, 0))
    out_spec = pl.BlockSpec((TN, TG, cpg, spatial), lambda i, j: (i, j, 0, 0))
    out_shape = jax.ShapeDtypeStruct((N, G, cpg, spatial), x.dtype)
    cparams = pltpu.CompilerParams(
        dimension_semantics=("parallel", "parallel"),
        vmem_limit_bytes=vmem_limit)

    if mask is None:
        kernel = functools.partial(_mgn_kernel_nomask, eps=float(eps))
        out = pl.pallas_call(
            kernel,
            out_shape=out_shape,
            grid=grid,
            in_specs=[x_spec, wb_spec, wb_spec],
            out_specs=out_spec,
            compiler_params=cparams,
        )(xg, w4, b4)
    else:
        # Un-expanded spatial mask in x's (narrow) dtype; broadcast in-kernel.
        mflat = jnp.asarray(mask).reshape(N, 1, 1, spatial).astype(x.dtype)
        m_spec = pl.BlockSpec((TN, 1, 1, spatial), lambda i, j: (i, 0, 0, 0))
        kernel = functools.partial(_mgn_kernel_mask, eps=float(eps))
        out = pl.pallas_call(
            kernel,
            out_shape=out_shape,
            grid=grid,
            in_specs=[x_spec, m_spec, wb_spec, wb_spec],
            out_specs=out_spec,
            compiler_params=cparams,
        )(xg, mflat, w4, b4)

    return out.reshape(original_shape)


# ---------------------------------------------------------------------------
# Pure-JAX reference (mirror of the PyTorch forward) for a sanity check
# ---------------------------------------------------------------------------
def _reference(x, num_groups, weight, bias, mask=None, eps=1e-5):
    original_shape = x.shape
    N, C = original_shape[0], original_shape[1]
    G = num_groups
    xg = x.reshape(N, G, -1)
    D = xg.shape[-1]
    if mask is not None:
        mflat = mask.reshape(N, -1).astype(x.dtype)
        spatial = mflat.shape[-1]
        mexp = jnp.broadcast_to(mflat[:, None, :], (N, C, spatial)).reshape(N, G, D)
        m = jnp.sum(mexp, axis=-1, keepdims=True)
        n = jnp.float32(D)
        mean_bias = jnp.mean(xg, axis=-1, keepdims=True)
        mean_real = mean_bias * n / (n - m + eps)
        x_f = xg * (1.0 - mexp) + mean_real * mexp
        var_bias = jnp.var(x_f, axis=-1, keepdims=True, ddof=1)
        var_real = var_bias * (n - 1.0) / (n - m - 1.0 + eps)
    else:
        mean_real = jnp.mean(xg, axis=-1, keepdims=True)
        var_real = jnp.var(xg, axis=-1, keepdims=True, ddof=1)
    y = (xg - mean_real) / jnp.sqrt(var_real + eps)
    y = y.reshape(N, C, -1)
    y = y * weight + bias
    return y.reshape(original_shape)


# ---------------------------------------------------------------------------
if __name__ == "__main__":
    num_groups = 2
    num_channels = 4
    eps = 1e-5

    # Non-trivial per-channel affine params (deterministic).
    weight = (1.0 + 0.1 * jnp.arange(num_channels, dtype=jnp.float32)).reshape(
        1, num_channels, 1)
    bias = (0.05 * jnp.arange(num_channels, dtype=jnp.float32)).reshape(
        1, num_channels, 1)

    key = jax.random.PRNGKey(0)
    kx, km = jax.random.split(key)
    x = jax.random.normal(kx, (2, num_channels, 16, 16), dtype=jnp.float32)
    # binary mask over spatial positions (1 = masked / padded)
    mask = (jax.random.uniform(km, (2, 16, 16)) < 0.3).astype(jnp.float32)

    # No-mask path (f32)
    out_nomask = jax.block_until_ready(
        mask_group_norm(x, num_groups, weight, bias, mask=None, eps=eps))
    ref_nomask = _reference(x, num_groups, weight, bias, mask=None, eps=eps)

    # Masked path (f32)
    out_mask = jax.block_until_ready(
        mask_group_norm(x, num_groups, weight, bias, mask=mask, eps=eps))
    ref_mask = _reference(x, num_groups, weight, bias, mask=mask, eps=eps)

    assert out_nomask.shape == x.shape and out_mask.shape == x.shape
    assert jnp.allclose(out_nomask, ref_nomask, atol=5e-4, rtol=1e-5)
    assert jnp.allclose(out_mask, ref_mask, atol=5e-4, rtol=1e-5)

    # bf16 end-to-end smoke test (review opt #9: keep narrow dtype in HBM).
    xb = x.astype(jnp.bfloat16)
    out_bf16 = jax.block_until_ready(
        mask_group_norm(xb, num_groups, weight, bias, mask=mask, eps=eps))
    assert out_bf16.dtype == jnp.bfloat16
    ref_bf16 = _reference(xb.astype(jnp.float32), num_groups, weight, bias,
                          mask=mask, eps=eps)
    assert jnp.allclose(out_bf16.astype(jnp.float32), ref_bf16,
                        atol=3e-2, rtol=2e-2)

    print("KERNEL_OK")
</pallas_src>

<mosaic_0001>
module attributes {stable_mosaic.version = 11 : i64} {
  func.func @_mgn_kernel_nomask(%arg0: i32, %arg1: i32, %arg2: memref<1x2x2x256xf32, #tpu.memory_space<vmem>>, %arg3: memref<1x2x2x1xf32, #tpu.memory_space<vmem>>, %arg4: memref<1x2x2x1xf32, #tpu.memory_space<vmem>>, %arg5: memref<1x2x2x256xf32, #tpu.memory_space<vmem>>) attributes {dimension_semantics = [#tpu.dimension_semantics<parallel>, #tpu.dimension_semantics<parallel>], iteration_bounds = array<i64: 2, 1>, scalar_prefetch = 0 : i64, scratch_operands = 0 : i64, tpu.core_type = #tpu.core_type<tc>, window_params = [{transform_indices = @transform_0, window_bounds = array<i64: 1, 2, 2, 256>}, {transform_indices = @transform_1, window_bounds = array<i64: 1, 2, 2, 1>}, {transform_indices = @transform_2, window_bounds = array<i64: 1, 2, 2, 1>}, {transform_indices = @transform_3, window_bounds = array<i64: 1, 2, 2, 256>}]} {
    %c0 = arith.constant 0 : index
    %c0_0 = arith.constant 0 : index
    %c0_1 = arith.constant 0 : index
    %c0_2 = arith.constant 0 : index
    %0 = vector.load %arg2[%c0, %c0_0, %c0_1, %c0_2] : memref<1x2x2x256xf32, #tpu.memory_space<vmem>>, vector<1x2x2x256xf32>
    %cst = arith.constant dense<0.000000e+00> : vector<1x2x2xf32>
    %1 = vector.multi_reduction <add>, %0, %cst [3] : vector<1x2x2x256xf32> to vector<1x2x2xf32>
    %2 = vector.shape_cast %1 : vector<1x2x2xf32> to vector<1x2x2x1xf32>
    %cst_3 = arith.constant dense<0.000000e+00> : vector<1x2x1xf32>
    %3 = vector.multi_reduction <add>, %2, %cst_3 [2] : vector<1x2x2x1xf32> to vector<1x2x1xf32>
    %4 = vector.shape_cast %3 : vector<1x2x1xf32> to vector<1x2x1x1xf32>
    %5 = arith.mulf %0, %0 : vector<1x2x2x256xf32>
    %cst_4 = arith.constant dense<0.000000e+00> : vector<1x2x2xf32>
    %6 = vector.multi_reduction <add>, %5, %cst_4 [3] : vector<1x2x2x256xf32> to vector<1x2x2xf32>
    %7 = vector.shape_cast %6 : vector<1x2x2xf32> to vector<1x2x2x1xf32>
    %cst_5 = arith.constant dense<0.000000e+00> : vector<1x2x1xf32>
    %8 = vector.multi_reduction <add>, %7, %cst_5 [2] : vector<1x2x2x1xf32> to vector<1x2x1xf32>
    %9 = vector.shape_cast %8 : vector<1x2x1xf32> to vector<1x2x1x1xf32>
    %cst_6 = arith.constant 5.120000e+02 : f32
    %10 = vector.broadcast %cst_6 : f32 to vector<1x2x1x1xf32>
    %11 = arith.divf %4, %10 : vector<1x2x1x1xf32>
    %12 = arith.mulf %4, %11 : vector<1x2x1x1xf32>
    %13 = arith.subf %9, %12 : vector<1x2x1x1xf32>
    %cst_7 = arith.constant 5.110000e+02 : f32
    %14 = vector.broadcast %cst_7 : f32 to vector<1x2x1x1xf32>
    %15 = arith.divf %13, %14 : vector<1x2x1x1xf32>
    %cst_8 = arith.constant 9.99999974E-6 : f32
    %16 = vector.broadcast %cst_8 : f32 to vector<1x2x1x1xf32>
    %17 = arith.addf %15, %16 : vector<1x2x1x1xf32>
    %18 = math.rsqrt %17 : vector<1x2x1x1xf32>
    %c0_9 = arith.constant 0 : index
    %c0_10 = arith.constant 0 : index
    %c0_11 = arith.constant 0 : index
    %c0_12 = arith.constant 0 : index
    %19 = vector.load %arg3[%c0_9, %c0_10, %c0_11, %c0_12] : memref<1x2x2x1xf32, #tpu.memory_space<vmem>>, vector<1x2x2x1xf32>
    %c0_13 = arith.constant 0 : index
    %c0_14 = arith.constant 0 : index
    %c0_15 = arith.constant 0 : index
    %c0_16 = arith.constant 0 : index
    %20 = vector.load %arg4[%c0_13, %c0_14, %c0_15, %c0_16] : memref<1x2x2x1xf32, #tpu.memory_space<vmem>>, vector<1x2x2x1xf32>
    %21 = vector.broadcast %18 : vector<1x2x1x1xf32> to vector<1x2x2x1xf32>
    %22 = arith.mulf %21, %19 : vector<1x2x2x1xf32>
    %23 = vector.broadcast %11 : vector<1x2x1x1xf32> to vector<1x2x2x1xf32>
    %24 = arith.mulf %23, %22 : vector<1x2x2x1xf32>
    %25 = arith.subf %20, %24 : vector<1x2x2x1xf32>
    %26 = vector.broadcast %22 : vector<1x2x2x1xf32> to vector<1x2x2x256xf32>
    %27 = arith.mulf %0, %26 : vector<1x2x2x256xf32>
    %28 = vector.broadcast %25 : vector<1x2x2x1xf32> to vector<1x2x2x256xf32>
    %29 = arith.addf %27, %28 : vector<1x2x2x256xf32>
    %c0_17 = arith.constant 0 : index
    %c0_18 = arith.constant 0 : index
    %c0_19 = arith.constant 0 : index
    %c0_20 = arith.constant 0 : index
    %30 = vector.load %arg5[%c0_17, %c0_18, %c0_19, %c0_20] : memref<1x2x2x256xf32, #tpu.memory_space<vmem>>, vector<1x2x2x256xf32>
    tpu.vector_store %arg5[%c0_17, %c0_18, %c0_19, %c0_20], %29 {strides = array<i32>} : memref<1x2x2x256xf32, #tpu.memory_space<vmem>>, vector<1x2x2x256xf32>,
    return
  }
  func.func @transform_0(%arg0: i32, %arg1: i32) -> (i32, i32, i32, i32) {
    %c0_i32 = arith.constant 0 : i32
    %c0_i32_0 = arith.constant 0 : i32
    %c0_i32_1 = arith.constant 0 : i32
    return %arg0, %arg1, %c0_i32, %c0_i32_0 : i32, i32, i32, i32
  }
  func.func @transform_1(%arg0: i32, %arg1: i32) -> (i32, i32, i32, i32) {
    %c0_i32 = arith.constant 0 : i32
    %c0_i32_0 = arith.constant 0 : i32
    %c0_i32_1 = arith.constant 0 : i32
    %c0_i32_2 = arith.constant 0 : i32
    return %c0_i32, %arg1, %c0_i32_0, %c0_i32_1 : i32, i32, i32, i32
  }
  func.func @transform_2(%arg0: i32, %arg1: i32) -> (i32, i32, i32, i32) {
    %c0_i32 = arith.constant 0 : i32
    %c0_i32_0 = arith.constant 0 : i32
    %c0_i32_1 = arith.constant 0 : i32
    %c0_i32_2 = arith.constant 0 : i32
    return %c0_i32, %arg1, %c0_i32_0, %c0_i32_1 : i32, i32, i32, i32
  }
  func.func @transform_3(%arg0: i32, %arg1: i32) -> (i32, i32, i32, i32) {
    %c0_i32 = arith.constant 0 : i32
    %c0_i32_0 = arith.constant 0 : i32
    %c0_i32_1 = arith.constant 0 : i32
    return %arg0, %arg1, %c0_i32, %c0_i32_0 : i32, i32, i32, i32
  }
}

</mosaic_0001>

<llo_original>
// kernel: tpu_custom_call.1
$region0: #{tpu_custom_call.1}
  #allocation0 [shape = 'u32[]', space=smem, size = 0x4, offset = 0x4, fixed_abs, tag = 'smem constant byte address 0x4 - core index']
  #allocation1 [shape = 'u32[72,128]{1,0:T(1,128)}', space=vmem, size = 0x9000, scoped, tag = 'internal scratch']
  %s0 = inlined_call_operand.hbm [shape: f32[2,2,2,256], index: 0, kind: input, shape index: {}]
  %s1 = inlined_call_operand.vmem [shape: f32[1,2,2,1], index: 1, kind: input, shape index: {}]
  %s2 = inlined_call_operand.vmem [shape: f32[1,2,2,1], index: 2, kind: input, shape index: {}]
  %s3 = inlined_call_operand.hbm [shape: f32[2,2,2,256], index: 3, kind: output, shape index: {}]
  %s4 = sld [smem:[#allocation0]]
  $region49: #{tpu_custom_call.1} parent=0
    _
  %s6 = ssub.s32 1, %s4
  %s7 = scalar_select 0, %s6, %s4
  $region1: #{tpu_custom_call.1} parent=0
    #allocation2 [shape = 'u8[8192]{0}', space=vmem, size = 0x2000, scoped, tag = 'input window, operand 0']
    #allocation3 [shape = 's32[2]{0}', space=sflag, size = 0x8, scoped, tag = 'scoped memory for tpu_custom_call.1']
    #allocation4 [shape = 's32[2]{0}', space=sflag, size = 0x8, scoped, tag = 'scoped memory for tpu_custom_call.1']
    #allocation5 [shape = 'u8[8192]{0}', space=vmem, size = 0x2000, scoped, tag = 'output window, operand 0']
    %8 = vsyncpa [#allocation3], 0
    %s9 = scalar_lea.sflag [#allocation3], 1
    %10 = vsyncpa %s9, 0
    %11 = vsyncpa [#allocation4], 0
    %s12 = scalar_lea.sflag [#allocation4], 1
    %13 = vsyncpa %s12, 0
    loop: start=0, step=1, limit=4
    $region2: #{tpu_custom_call.1} parent=1 // loop_pre_header
      _
    $region3: #{tpu_custom_call.1} parent=1 // loop_header
      %s15 = sphi 0, %s19
      %p16 = scmp.ge.s32.totalorder %s15, 4
      %s22 = sphi 0, %s34
      %s23 = sphi 0, %s30
      %s24 = sphi 0, %s22
      %s25 = sphi 0, %s23
      %s26 = sphi 0, %s24
      %s27 = sphi 0, %s25
      %s39 = sphi 0, %s41
      %s42 = sphi 0, %s39
      %s43 = sphi 0, %s42
      %s59 = sphi 0, %s43
      %s65 = sphi 0, %s67
      %s68 = sphi 0, %s65
      %s69 = sphi 0, %s68
      %s85 = sphi 0, %s69
      %s91 = sphi 0, %s93
      %s94 = sphi 0, %s91
      %s95 = sphi 0, %s94
      %s111 = sphi 0, %s95
      %s119 = sphi 0, %s121
      %s122 = sphi 0, %s119
      %s123 = sphi 0, %s122
      %s139 = sphi 0, %s123
    $region4: #{tpu_custom_call.1} parent=1 // loop_header_branch
      %18 = sbr.rel (%p16) target = $region8
    $region5: #{tpu_custom_call.1} parent=1 // loop_body
      %s20 = ssub.s32 %s15, 1
      %s21 = ssub.s32 %s15, 2
      %s28 = sadd.s32 1, %s23
      %p29 = scmp.ge.s32.totalorder %s28, 1
      %s30 = scalar_select %p29, 0, %s28
      %s31 = sadd.s32 1, %s22
      %s32 = scalar_select %p29, %s31, %s22
      %p33 = scmp.ge.s32.totalorder %s32, 2
      %s34 = scalar_select %p33, 0, %s32
      %s35 = ssub.s32 %s22, %s34
      %s36 = ssub.s32 %s23, %s30
      %s37 = sor.u32 %s35, %s36
      %p38 = scmp.eq.s32.totalorder %s37, 0
      %s40 = sadd.s32 %s39, 1
      %s41 = scalar_select %p38, %s39, %s40
      %p44 = pneg %p38
      %p45 = scmp.eq.s32.totalorder %s15, 1
      %p46 = por %p44, %p45
      %p47 = scmp.ne.s32.totalorder %s39, %s42
      %p48 = scmp.eq.s32.totalorder %s15, 0
      %p49 = por %p47, %p48
      %p50 = scmp.ne.s32.totalorder %s39, %s42
      %p51 = scmp.eq.s32.totalorder %s20, 1
      %p52 = por %p50, %p51
      %p53 = scmp.ne.s32.totalorder %s42, %s43
      %p54 = scmp.eq.s32.totalorder %s20, 0
      %p55 = por %p53, %p54
      %p56 = scmp.ne.s32.totalorder %s42, %s43
      %p57 = scmp.eq.s32.totalorder %s21, 1
      %p58 = por %p56, %p57
      %p60 = scmp.ne.s32.totalorder %s43, %s59
      %p61 = scmp.eq.s32.totalorder %s21, 0
      %p62 = por %p60, %p61
      %s63 = ssub.s32 %s23, %s30
      %p64 = scmp.eq.s32.totalorder %s63, 0
      %s66 = sadd.s32 %s65, 1
      %s67 = scalar_select %p64, %s65, %s66
      %p70 = pneg %p64
      %p71 = scmp.eq.s32.totalorder %s15, 1
      %p72 = por %p70, %p71
      %p73 = scmp.ne.s32.totalorder %s65, %s68
      %p74 = scmp.eq.s32.totalorder %s15, 0
      %p75 = por %p73, %p74
      %p76 = scmp.ne.s32.totalorder %s65, %s68
      %p77 = scmp.eq.s32.totalorder %s20, 1
      %p78 = por %p76, %p77
      %p79 = scmp.ne.s32.totalorder %s68, %s69
      %p80 = scmp.eq.s32.totalorder %s20, 0
      %p81 = por %p79, %p80
      %p82 = scmp.ne.s32.totalorder %s68, %s69
      %p83 = scmp.eq.s32.totalorder %s21, 1
      %p84 = por %p82, %p83
      %p86 = scmp.ne.s32.totalorder %s69, %s85
      %p87 = scmp.eq.s32.totalorder %s21, 0
      %p88 = por %p86, %p87
      %s89 = ssub.s32 %s23, %s30
      %p90 = scmp.eq.s32.totalorder %s89, 0
      %s92 = sadd.s32 %s91, 1
      %s93 = scalar_select %p90, %s91, %s92
      %p96 = pneg %p90
      %p97 = scmp.eq.s32.totalorder %s15, 1
      %p98 = por %p96, %p97
      %p99 = scmp.ne.s32.totalorder %s91, %s94
      %p100 = scmp.eq.s32.totalorder %s15, 0
      %p101 = por %p99, %p100
      %p102 = scmp.ne.s32.totalorder %s91, %s94
      %p103 = scmp.eq.s32.totalorder %s20, 1
      %p104 = por %p102, %p103
      %p105 = scmp.ne.s32.totalorder %s94, %s95
      %p106 = scmp.eq.s32.totalorder %s20, 0
      %p107 = por %p105, %p106
      %p108 = scmp.ne.s32.totalorder %s94, %s95
      %p109 = scmp.eq.s32.totalorder %s21, 1
      %p110 = por %p108, %p109
      %p112 = scmp.ne.s32.totalorder %s95, %s111
      %p113 = scmp.eq.s32.totalorder %s21, 0
      %p114 = por %p112, %p113
      %s115 = ssub.s32 %s22, %s34
      %s116 = ssub.s32 %s23, %s30
      %s117 = sor.u32 %s115, %s116
      %p118 = scmp.eq.s32.totalorder %s117, 0
      %s120 = sadd.s32 %s119, 1
      %s121 = scalar_select %p118, %s119, %s120
      %p124 = pneg %p118
      %p125 = scmp.eq.s32.totalorder %s15, 1
      %p126 = por %p124, %p125
      %p127 = scmp.ne.s32.totalorder %s119, %s122
      %p128 = scmp.eq.s32.totalorder %s15, 0
      %p129 = por %p127, %p128
      %p130 = scmp.ne.s32.totalorder %s119, %s122
      %p131 = scmp.eq.s32.totalorder %s20, 1
      %p132 = por %p130, %p131
      %p133 = scmp.ne.s32.totalorder %s122, %s123
      %p134 = scmp.eq.s32.totalorder %s20, 0
      %p135 = por %p133, %p134
      %p136 = scmp.ne.s32.totalorder %s122, %s123
      %p137 = scmp.eq.s32.totalorder %s21, 1
      %p138 = por %p136, %p137
      %p140 = scmp.ne.s32.totalorder %s123, %s139
      %p141 = scmp.eq.s32.totalorder %s21, 0
      %p142 = por %p140, %p141
      %p143 = scmp.le.s32.totalorder 1, %s15
      %p144 = scmp.lt.s32.totalorder %s15, 3
      %p145 = pnand %p143, %p144
      %p146 = pneg %p145
      // Predicated region
      $region9: #{tpu_custom_call.1} parent=5 // pred_check
        _
      $region10: #{tpu_custom_call.1} parent=5 // pred_check_branch
        %148 = sbr.rel (%p145) target = $region12
      $region11: #{tpu_custom_call.1} parent=5 // pred_region
        %s149 = ssub.s32 %s15, 1
        // Predicated region
        $region13: #{tpu_custom_call.1} parent=11 // pred_check
          %p150 = pneg %p81
        $region14: #{tpu_custom_call.1} parent=11 // pred_check_branch
          %152 = sbr.rel (%p150) target = $region16
        $region15: #{tpu_custom_call.1} parent=11 // pred_region
          %s153 = smul.u32 2, %s25
          %p154 = scmp.lt.s32.totalorder %s153, 1
          %s155 = scalar_select %p154, %s153, 1
          %s156 = smul.addr %s155, 2
          %s157 = scalar_lea.vmem %s1, %s156
          %s158 = smul.u32 2, %s25
        $region16: #{tpu_custom_call.1} parent=11 // pred_fallthru
          _
        // Predicated region
        $region17: #{tpu_custom_call.1} parent=11 // pred_check
          %p159 = pneg %p107
        $region18: #{tpu_custom_call.1} parent=11 // pred_check_branch
          %161 = sbr.rel (%p159) target = $region20
        $region19: #{tpu_custom_call.1} parent=11 // pred_region
          %s162 = smul.u32 2, %s25
          %p163 = scmp.lt.s32.totalorder %s162, 1
          %s164 = scalar_select %p163, %s162, 1
          %s165 = smul.addr %s164, 2
          %s166 = scalar_lea.vmem %s2, %s165
          %s167 = smul.u32 2, %s25
        $region20: #{tpu_custom_call.1} parent=11 // pred_fallthru
          _
      $region12: #{tpu_custom_call.1} parent=5 // pred_fallthru
        _
      %p168 = scmp.lt.s32.totalorder %s15, 2
      // Predicated region
      $region21: #{tpu_custom_call.1} parent=5 // pred_check
        %p169 = pneg %p168
      $region22: #{tpu_custom_call.1} parent=5 // pred_check_branch
        %171 = sbr.rel (%p169) target = $region24
      $region23: #{tpu_custom_call.1} parent=5 // pred_region
        // Predicated region
        $region25: #{tpu_custom_call.1} parent=23 // pred_check
          %p172 = pneg %p49
        $region26: #{tpu_custom_call.1} parent=23 // pred_check_branch
          %174 = sbr.rel (%p172) target = $region28
        $region27: #{tpu_custom_call.1} parent=23 // pred_region
          %s175 = sand.u32 %s39, 1
          %s176 = scalar_lea.sflag [#allocation3], %s175
          %s177 = sand.u32 %s39, 1
          %s178 = smul.addr %s177, 8
          %s179 = scalar_lea.vmem [#allocation2], %s178
          %s180 = smul.u32 2, %s23
          %182 = vsyncadd %s176, 0
          %s183 = smul.addr %s180, 2
          %s184 = smul.addr %s22, 4
          %s185 = sadd.s32 %s183, %s184
          %s186 = smul.addr %s185, 2
          %s187 = scalar_lea.hbm %s0, %s186
          %s188 = sshll.u32 %s187, 4
          %s189 = int_to_ptr.hbm [resolvable:$true] %s188
          %s190 = sshll.u32 %s179, 4
          %s191 = int_to_ptr.vmem [resolvable:$true] %s190
          %196 = dma.hbm_to_vmem [thread:$0]  %s189, 128, %s191, %s176, 64, 64, 4
        $region28: #{tpu_custom_call.1} parent=23 // pred_fallthru
          _
      $region24: #{tpu_custom_call.1} parent=5 // pred_fallthru
        _
      %p197 = scmp.le.s32.totalorder 1, %s15
      %p198 = scmp.lt.s32.totalorder %s15, 3
      %p199 = pnand %p197, %p198
      %p200 = pneg %p199
      // Predicated region
      $region29: #{tpu_custom_call.1} parent=5 // pred_check
        _
      $region30: #{tpu_custom_call.1} parent=5 // pred_check_branch
        %202 = sbr.rel (%p199) target = $region32
      $region31: #{tpu_custom_call.1} parent=5 // pred_region
        %s203 = ssub.s32 %s15, 1
        %s204 = sand.u32 %s42, 1
        %s205 = scalar_lea.sflag [#allocation3], %s204
        %s206 = sand.u32 %s42, 1
        %s207 = smul.addr %s206, 8
        %s208 = scalar_lea.vmem [#allocation2], %s207
        // Predicated region
        $region33: #{tpu_custom_call.1} parent=31 // pred_check
          %p209 = pneg %p55
        $region34: #{tpu_custom_call.1} parent=31 // pred_check_branch
          %211 = sbr.rel (%p209) target = $region36
        $region35: #{tpu_custom_call.1} parent=31 // pred_region
          %213 = dma.done %s205, 128
        $region36: #{tpu_custom_call.1} parent=31 // pred_fallthru
          _
        %s214 = sand.u32 %s42, 1
        %s215 = scalar_lea.sflag [#allocation3], %s214
        %s216 = sand.u32 %s42, 1
        %s217 = smul.addr %s216, 8
        %s218 = scalar_lea.vmem [#allocation2], %s217
        %p219 = pneg %p55
        %p220 = pneg %p52
        %s221 = smul.u32 2, %s25
        %p222 = scmp.lt.s32.totalorder %s221, 1
        %s223 = scalar_select %p222, %s221, 1
        %s224 = smul.addr %s223, 2
        %s225 = scalar_lea.vmem %s1, %s224
        %p226 = pneg %p81
        %p227 = pneg %p78
        %s228 = smul.u32 2, %s25
        %p229 = scmp.lt.s32.totalorder %s228, 1
        %s230 = scalar_select %p229, %s228, 1
        %s231 = smul.addr %s230, 2
        %s232 = scalar_lea.vmem %s2, %s231
        %p233 = pneg %p107
        %p234 = pneg %p104
        %p235 = pneg %p135
        %p236 = pneg %p132
        %s237 = sand.u32 %s122, 1
        %s238 = scalar_lea.sflag [#allocation4], %s237
        %s239 = sand.u32 %s122, 1
        %s240 = smul.addr %s239, 8
        %s241 = scalar_lea.vmem [#allocation5], %s240
        %s242 = smul.u32 2, %s25
        %s243 = smul.u32 2, %s25
        %p244 = scmp.lt.s32.totalorder %s243, 1
        %s245 = scalar_select %p244, %s243, 1
        %s246 = smul.addr %s245, 2
        %s247 = scalar_lea.vmem %s1, %s246
        %s248 = smul.u32 2, %s25
        %s249 = smul.u32 2, %s25
        %p250 = scmp.lt.s32.totalorder %s249, 1
        %s251 = scalar_select %p250, %s249, 1
        %s252 = smul.addr %s251, 2
        %s253 = scalar_lea.vmem %s2, %s252
        %s254 = smul.u32 2, %s25
        %s255 = smul.u32 2, %s25
        %v256 = vld [vmem:[%s208] sm:$0xf]
        %v257 = vld [vmem:[%s208 + $0x4] sm:$0xf]
        %260 = vst [vmem:[#allocation1] ss:$4 sm:$0xff] %v256
        %v261 = vld.sshfl [vmem:[#allocation1] sm:$0xff pattern:$0x73625140]
        %v262 = vld.sshfl [vmem:[#allocation1 + $0x8] sm:$0xff pattern:$0x73625140]
        %s263 = scalar_lea.vmem [#allocation1], 32
        %264 = vst [vmem:[%s263] ss:$4 sm:$0xff] %v257
        %v265 = vld.sshfl [vmem:[#allocation1 + $0x20] sm:$0xff pattern:$0x73625140]
        %v266 = vld.sshfl [vmem:[#allocation1 + $0x28] sm:$0xff pattern:$0x73625140]
        %vm271 = vcmask 1041408
        %v272 = vsel %vm271, %v261, 0.0
        %v273 = vsel %vm271, %v262, 0.0
        %v274 = vadd.f32 %v272, %v273
        %275 = vadd.xlane.f32.xlu0 %v274
        %v276 = vpop.xlane.xlu0 %275
        %v277 = vsel %vm271, %v265, 0.0
        %v278 = vsel %vm271, %v266, 0.0
        %v279 = vadd.f32 %v277, %v278
        %280 = vadd.xlane.f32.xlu0 %v279
        %v281 = vpop.xlane.xlu0 %280
        %v282 = vsel %vm271, %v276, 0.0
        %v283 = vrot.slane %v282, 4
        %v284 = vadd.f32 %v282, %v283
        %v285 = vrot.slane %v284, 2
        %v286 = vadd.f32 %v284, %v285
        %v287 = vrot.slane %v286, 1
        %v288 = vadd.f32 %v286, %v287
        %v289 = vsel %vm271, %v281, 0.0
        %v290 = vrot.slane %v289, 4
        %v291 = vadd.f32 %v289, %v290
        %v292 = vrot.slane %v291, 2
        %v293 = vadd.f32 %v291, %v292
        %v294 = vrot.slane %v293, 1
        %v295 = vadd.f32 %v293, %v294
        %v296 = vmul.f32 %v256, %v256
        %v297 = vmul.f32 %v257, %v257
        %300 = vst [vmem:[#allocation1] ss:$4 sm:$0xff] %v296
        %v301 = vld.sshfl [vmem:[#allocation1] sm:$0xff pattern:$0x73625140]
        %v302 = vld.sshfl [vmem:[#allocation1 + $0x8] sm:$0xff pattern:$0x73625140]
        %s303 = scalar_lea.vmem [#allocation1], 32
        %304 = vst [vmem:[%s303] ss:$4 sm:$0xff] %v297
        %v305 = vld.sshfl [vmem:[#allocation1 + $0x20] sm:$0xff pattern:$0x73625140]
        %v306 = vld.sshfl [vmem:[#allocation1 + $0x28] sm:$0xff pattern:$0x73625140]
        %v311 = vsel %vm271, %v301, 0.0
        %v312 = vsel %vm271, %v302, 0.0
        %v313 = vadd.f32 %v311, %v312
        %314 = vadd.xlane.f32.xlu0 %v313
        %v315 = vpop.xlane.xlu0 %314
        %v316 = vsel %vm271, %v305, 0.0
        %v317 = vsel %vm271, %v306, 0.0
        %v318 = vadd.f32 %v316, %v317
        %319 = vadd.xlane.f32.xlu0 %v318
        %v320 = vpop.xlane.xlu0 %319
        %v321 = vsel %vm271, %v315, 0.0
        %v322 = vrot.slane %v321, 4
        %v323 = vadd.f32 %v321, %v322
        %v324 = vrot.slane %v323, 2
        %v325 = vadd.f32 %v323, %v324
        %v326 = vrot.slane %v325, 1
        %v327 = vadd.f32 %v325, %v326
        %v328 = vsel %vm271, %v320, 0.0
        %v329 = vrot.slane %v328, 4
        %v330 = vadd.f32 %v328, %v329
        %v331 = vrot.slane %v330, 2
        %v332 = vadd.f32 %v330, %v331
        %v333 = vrot.slane %v332, 1
        %v334 = vadd.f32 %v332, %v333
        %v335 = vrcp.pop 512.0
        %v336 = vmul.f32 512.0, %v335
        %v337 = vsub.f32 1.0, %v336
        %v338 = vmul.f32 %v335, %v337
        %v339 = vadd.f32 %v335, %v338
        %vm340 = vweird.f32 %v335
        %v341 = vsel %vm340, %v335, %v339
        %v342 = vmul.f32 %v288, %v341
        %v343 = vmul.f32 %v295, %v341
        %v344 = vmul.f32 %v288, %v342
        %v345 = vmul.f32 %v295, %v343
        %v346 = vsub.f32 %v327, %v344
        %v347 = vsub.f32 %v334, %v345
        %v348 = vrcp.pop 511.0
        %v349 = vmul.f32 511.0, %v348
        %v350 = vsub.f32 1.0, %v349
        %v351 = vmul.f32 %v348, %v350
        %v352 = vadd.f32 %v348, %v351
        %vm353 = vweird.f32 %v348
        %v354 = vsel %vm353, %v348, %v352
        %v355 = vmul.f32 %v346, %v354
        %v356 = vmul.f32 %v347, %v354
        %v357 = vadd.f32 %v355, 1e-05
        %v358 = vadd.f32 %v356, 1e-05
        %v359 = vrsqrt.pop %v357
        %v360 = vmul.f32 %v359, %v357
        %v361 = vmul.f32 %v360, %v359
        %v362 = vmul.f32 0.5, %v361
        %v363 = vsub.f32 1.5, %v362
        %v364 = vmul.f32 %v359, %v363
        %vm365 = vweird.f32 %v357
        %vm366 = vweird.f32 %v359
        %vm367 = vmor %vm365, %vm366
        %v368 = vsel %vm367, %v359, %v364
        %v369 = vrsqrt.pop %v358
        %v370 = vmul.f32 %v369, %v358
        %v371 = vmul.f32 %v370, %v369
        %v372 = vmul.f32 0.5, %v371
        %v373 = vsub.f32 1.5, %v372
        %v374 = vmul.f32 %v369, %v373
        %vm375 = vweird.f32 %v358
        %vm376 = vweird.f32 %v369
        %vm377 = vmor %vm375, %vm376
        %v378 = vsel %vm377, %v369, %v374
        %v379 = vld [vmem:[%s247] sm:$0x3]
        %v380 = vld [vmem:[%s247 + $0x2] sm:$0x3]
        %v381 = vld [vmem:[%s253] sm:$0x3]
        %v382 = vld [vmem:[%s253 + $0x2] sm:$0x3]
        %v383 = vmul.f32 %v368, %v379
        %v384 = vmul.f32 %v378, %v380
        %v385 = vmul.f32 %v342, %v383
        %v386 = vmul.f32 %v343, %v384
        %v387 = vsub.f32 %v381, %v385
        %v388 = vsub.f32 %v382, %v386
        %390 = vset.pattern.permute.xlu0 0
        %391 = vperm.xlu0 %390, %v383
        %v392 = vpop.permute.xlu0 %391
        %394 = vset.pattern.permute.xlu0 0
        %395 = vperm.xlu0 %394, %v384
        %v396 = vpop.permute.xlu0 %395
        %v398 = vunpack.c.l.s4 269488144
        %v399 = vunpack.c.0.s8 %v398
        %v400 = vperm.slane %v392, %v399
        %v402 = vunpack.c.l.s4 269488144
        %v403 = vunpack.c.0.s8 %v402
        %v404 = vperm.slane %v396, %v403
        %v407 = vmul.f32 %v256, %v400
        %v408 = vmul.f32 %v257, %v404
        %410 = vset.pattern.permute.xlu0 0
        %411 = vperm.xlu0 %410, %v387
        %v412 = vpop.permute.xlu0 %411
        %414 = vset.pattern.permute.xlu0 0
        %415 = vperm.xlu0 %414, %v388
        %v416 = vpop.permute.xlu0 %415
        %v418 = vunpack.c.l.s4 269488144
        %v419 = vunpack.c.0.s8 %v418
        %v420 = vperm.slane %v412, %v419
        %v422 = vunpack.c.l.s4 269488144
        %v423 = vunpack.c.0.s8 %v422
        %v424 = vperm.slane %v416, %v423
        %v427 = vadd.f32 %v407, %v420
        %v428 = vadd.f32 %v408, %v424
        %429 = vst [vmem:[%s241] sm:$0xf] %v427
        %430 = vst [vmem:[%s241 + $0x4] sm:$0xf] %v428
        %s431 = sand.u32 %s122, 1
        %s432 = scalar_lea.sflag [#allocation4], %s431
        %s433 = sand.u32 %s122, 1
        %s434 = smul.addr %s433, 8
        %s435 = scalar_lea.vmem [#allocation5], %s434
        // Predicated region
        $region37: #{tpu_custom_call.1} parent=31 // pred_check
          %p436 = pneg %p132
        $region38: #{tpu_custom_call.1} parent=31 // pred_check_branch
          %438 = sbr.rel (%p436) target = $region40
        $region39: #{tpu_custom_call.1} parent=31 // pred_region
          %s439 = smul.u32 2, %s25
          %441 = vsyncadd %s432, 0
          %s442 = smul.addr %s439, 2
          %s443 = smul.addr %s24, 4
          %s444 = sadd.s32 %s442, %s443
          %s445 = smul.addr %s444, 2
          %s446 = scalar_lea.hbm %s3, %s445
          %s447 = sshll.u32 %s435, 4
          %s448 = int_to_ptr.vmem [resolvable:$true] %s447
          %s449 = sshll.u32 %s446, 4
          %s450 = int_to_ptr.hbm [resolvable:$true] %s449
          %455 = dma.vmem_to_hbm [thread:$0]  %s448, 128, %s450, %s432, 64, 64, 4
        $region40: #{tpu_custom_call.1} parent=31 // pred_fallthru
          _
      $region32: #{tpu_custom_call.1} parent=5 // pred_fallthru
        _
      %p456 = scmp.le.s32.totalorder 2, %s15
      // Predicated region
      $region41: #{tpu_custom_call.1} parent=5 // pred_check
        %p457 = pneg %p456
      $region42: #{tpu_custom_call.1} parent=5 // pred_check_branch
        %459 = sbr.rel (%p457) target = $region44
      $region43: #{tpu_custom_call.1} parent=5 // pred_region
        %s460 = ssub.s32 %s15, 2
        // Predicated region
        $region45: #{tpu_custom_call.1} parent=43 // pred_check
          %p461 = pneg %p138
        $region46: #{tpu_custom_call.1} parent=43 // pred_check_branch
          %463 = sbr.rel (%p461) target = $region48
        $region47: #{tpu_custom_call.1} parent=43 // pred_region
          %s464 = sand.u32 %s123, 1
          %s465 = scalar_lea.sflag [#allocation4], %s464
          %s466 = sand.u32 %s123, 1
          %s467 = smul.addr %s466, 8
          %s468 = scalar_lea.vmem [#allocation5], %s467
          %470 = dma.done %s465, 128
        $region48: #{tpu_custom_call.1} parent=43 // pred_fallthru
          _
      $region44: #{tpu_custom_call.1} parent=5 // pred_fallthru
        _
    $region6: #{tpu_custom_call.1} parent=1 // loop_footer
      %s19 = sadd.s32 1, %s15
    $region7: #{tpu_custom_call.1} parent=1 // loop_footer_branch
      %14 = sbr.rel target = $region3
    $region8: #{tpu_custom_call.1} parent=1 // loop_exit
      _
    %471 = vsyncpa [#allocation3], 1
    %s472 = scalar_lea.sflag [#allocation3], 1
    %473 = vsyncpa %s472, 1
    %474 = vsyncpa [#allocation4], 1
    %s475 = scalar_lea.sflag [#allocation4], 1
    %476 = vsyncpa %s475, 1

</llo_original>
